<compile_context>
chip_gen: v7x
topology: tpu7x:2x2x1
jax: 0.10.0
libtpu: 0.0.40
codegen_flags: <defaults>
</compile_context>

<pallas_src>
import functools

import jax
import jax.numpy as jnp
from jax.experimental import pallas as pl
from jax.experimental.pallas import tpu as pltpu


# ----------------------------------------------------------------------------
# VMEM budget (per-generation): ~85% of physical VMEM, safe fallback 48 MiB.
# ----------------------------------------------------------------------------
def _vmem_limit_bytes():
    try:
        info = pltpu.get_tpu_info()
        for attr in ("vmem_capacity_bytes", "vmem_size_bytes", "vmem_bytes"):
            cap = getattr(info, attr, None)
            if cap:
                return int(cap * 0.85)
    except Exception:
        pass
    return 48 * 1024 * 1024


VMEM_LIMIT_BYTES = _vmem_limit_bytes()


# ----------------------------------------------------------------------------
# Helpers
# ----------------------------------------------------------------------------
def _layer_norm(y, gamma, beta, eps):
    mu = jnp.mean(y, axis=-1, keepdims=True)
    var = jnp.mean((y - mu) ** 2, axis=-1, keepdims=True)
    return (y - mu) * jax.lax.rsqrt(var + eps) * gamma + beta


def _tile(n, target, align):
    """Largest divisor of n that is <= target and a multiple of `align`; else n."""
    if n <= target:
        return n
    t = (target // align) * align
    while t >= align:
        if n % t == 0:
            return t
        t -= align
    return n


def dft_real_matrices(n):
    # Reduce k*k' mod n in int32 before scaling so the trig argument stays in
    # [0, 2*pi); f32 angle rounding then does not grow with n.
    k = jnp.arange(n, dtype=jnp.int32)
    prod = (k[:, None] * k[None, :]) % n
    ang = (2.0 * jnp.pi / n) * prod.astype(jnp.float32)
    return jnp.cos(ang), jnp.sin(ang)


# ----------------------------------------------------------------------------
# Pallas kernels
# ----------------------------------------------------------------------------
def embeddings_kernel(emb_ref, g_ref, b_ref, w_ref, bias_ref, o_ref, *, eps):
    # emb_ref: (1, tS, E) summed word+pos+type embeddings (f32).
    e = emb_ref[0]                                             # (tS, E)
    y = _layer_norm(e, g_ref[...], b_ref[...], eps)            # f32 LayerNorm
    o_ref[0] = (jnp.dot(y.astype(jnp.bfloat16), w_ref[...],    # bf16 MXU matmul
                        preferred_element_type=jnp.float32)
                + bias_ref[...])                               # (tS, H) f32


def fnet_layer_kernel(x_ref, ch_ref, sh_ref, cs_ref, ss_ref,
                      g1_ref, b1_ref, wff_ref, bff_ref, wo_ref, bo_ref,
                      g2_ref, b2_ref, o_ref, *, eps):
    """One fused FNet encoder layer: Fourier mixing + LN1 + FFN + LN2."""
    x = x_ref[0]                                               # (S, H) f32
    xb = x.astype(jnp.bfloat16)

    # Hidden-dim DFT (cos / sin parts) — two dots, no (S, 2H) f32 intermediate.
    xc = jnp.dot(xb, ch_ref[...],
                 preferred_element_type=jnp.float32).astype(jnp.bfloat16)
    xs = jnp.dot(xb, sh_ref[...],
                 preferred_element_type=jnp.float32).astype(jnp.bfloat16)

    # Seq-dim DFT real part: Re(F_s @ x @ F_h) = C_s @ xc - S_s @ xs.
    fft_real = (jnp.dot(cs_ref[...], xc, preferred_element_type=jnp.float32)
                - jnp.dot(ss_ref[...], xs, preferred_element_type=jnp.float32))

    y = _layer_norm(fft_real + x, g1_ref[...], b1_ref[...], eps)   # (S, H) f32

    # FFN with VMEM-resident weights (no reduction grid axis / accumulator).
    h = (jnp.dot(y.astype(jnp.bfloat16), wff_ref[...],
                 preferred_element_type=jnp.float32) + bff_ref[...])
    h = jax.nn.gelu(h, approximate=False)                      # exact GELU (nn.GELU())
    out = (jnp.dot(h.astype(jnp.bfloat16), wo_ref[...],
                   preferred_element_type=jnp.float32) + bo_ref[...])

    o_ref[0] = _layer_norm(out + y, g2_ref[...], b2_ref[...], eps)


# ----------------------------------------------------------------------------
# pallas_call wrappers
# ----------------------------------------------------------------------------
def run_embeddings(summed_emb, ln_g, ln_b, w_map_bf16, b_map, eps):
    B, S, E = summed_emb.shape
    H = w_map_bf16.shape[1]
    tS = _tile(S, 512, 16)   # 16-aligned sublane tiles (bf16 packing)
    return pl.pallas_call(
        functools.partial(embeddings_kernel, eps=eps),
        out_shape=jax.ShapeDtypeStruct((B, S, H), jnp.float32),
        grid=(B, S // tS),
        in_specs=[
            pl.BlockSpec((1, tS, E), lambda b, s: (b, s, 0)),
            pl.BlockSpec((1, E), lambda b, s: (0, 0)),
            pl.BlockSpec((1, E), lambda b, s: (0, 0)),
            pl.BlockSpec((E, H), lambda b, s: (0, 0)),
            pl.BlockSpec((1, H), lambda b, s: (0, 0)),
        ],
        out_specs=pl.BlockSpec((1, tS, H), lambda b, s: (b, s, 0)),
        compiler_params=pltpu.CompilerParams(
            dimension_semantics=("parallel", "parallel"),
            vmem_limit_bytes=VMEM_LIMIT_BYTES),
    )(summed_emb, ln_g, ln_b, w_map_bf16, b_map)


def run_fnet_layer(x, consts, lw, eps):
    B, S, H = x.shape
    I = lw["w_ff_bf16"].shape[1]
    return pl.pallas_call(
        functools.partial(fnet_layer_kernel, eps=eps),
        out_shape=jax.ShapeDtypeStruct((B, S, H), jnp.float32),
        grid=(B,),
        in_specs=[
            pl.BlockSpec((1, S, H), lambda b: (b, 0, 0)),     # x
            pl.BlockSpec((H, H), lambda b: (0, 0)),           # C_h (bf16)
            pl.BlockSpec((H, H), lambda b: (0, 0)),           # S_h (bf16)
            pl.BlockSpec((S, S), lambda b: (0, 0)),           # C_s (bf16)
            pl.BlockSpec((S, S), lambda b: (0, 0)),           # S_s (bf16)
            pl.BlockSpec((1, H), lambda b: (0, 0)),           # ln1 gamma
            pl.BlockSpec((1, H), lambda b: (0, 0)),           # ln1 beta
            pl.BlockSpec((H, I), lambda b: (0, 0)),           # w_ff (bf16, resident)
            pl.BlockSpec((1, I), lambda b: (0, 0)),           # b_ff
            pl.BlockSpec((I, H), lambda b: (0, 0)),           # w_out (bf16, resident)
            pl.BlockSpec((1, H), lambda b: (0, 0)),           # b_out
            pl.BlockSpec((1, H), lambda b: (0, 0)),           # ln2 gamma
            pl.BlockSpec((1, H), lambda b: (0, 0)),           # ln2 beta
        ],
        out_specs=pl.BlockSpec((1, S, H), lambda b: (b, 0, 0)),
        compiler_params=pltpu.CompilerParams(
            dimension_semantics=("parallel",),
            vmem_limit_bytes=VMEM_LIMIT_BYTES),
    )(x, consts["ch"], consts["sh"], consts["cs"], consts["ss"],
      lw["ln1_g"], lw["ln1_b"], lw["w_ff_bf16"], lw["b_ff"],
      lw["w_out_bf16"], lw["b_out"], lw["ln2_g"], lw["ln2_b"])


# ----------------------------------------------------------------------------
# One-time preparation: pre-cast matmul weights to bf16, build DFT matrices.
# ----------------------------------------------------------------------------
def prepare_model(params, cfg, seq_len):
    H = cfg["hidden_size"]
    cs, ss = dft_real_matrices(seq_len)
    ch, sh = dft_real_matrices(H)
    consts = dict(cs=cs.astype(jnp.bfloat16), ss=ss.astype(jnp.bfloat16),
                  ch=ch.astype(jnp.bfloat16), sh=sh.astype(jnp.bfloat16))
    layers = []
    for lp in params["layers"]:
        lw = dict(lp)
        lw["w_ff_bf16"] = lp["w_ff"].astype(jnp.bfloat16)
        lw["w_out_bf16"] = lp["w_out"].astype(jnp.bfloat16)
        layers.append(lw)
    model = dict(params)
    model["w_map_bf16"] = params["w_map"].astype(jnp.bfloat16)
    model["layers_prepared"] = layers
    model["consts"] = consts
    return model


# ----------------------------------------------------------------------------
# Full model
# ----------------------------------------------------------------------------
def fnet_forward(model, input_ids, type_ids, cfg):
    B, S = input_ids.shape
    eps = cfg["layer_norm_eps"]

    # --- embeddings (table gathers are XLA glue; LN + projection in-kernel) ---
    pos_ids = jnp.arange(S)
    summed = (model["word_emb"][input_ids]
              + model["pos_emb"][pos_ids][None, :, :]
              + model["type_emb"][type_ids]).astype(jnp.float32)
    hidden = run_embeddings(summed, model["emb_ln_g"], model["emb_ln_b"],
                            model["w_map_bf16"], model["b_map"], eps)

    # --- encoder: one fused pallas_call per layer ---
    for lw in model["layers_prepared"]:
        hidden = run_fnet_layer(hidden, model["consts"], lw, eps)

    # --- pooler: tiny (B, H) matmul, plain XLA ---
    pooled = jnp.tanh(hidden[:, 0, :] @ model["pool_w"] + model["pool_b"])
    return hidden, pooled


# ----------------------------------------------------------------------------
# Pure-JAX references
# ----------------------------------------------------------------------------
def fnet_reference_fft_f32(params, input_ids, type_ids, cfg):
    """Original semantics: jnp.fft + full f32 weights."""
    eps = cfg["layer_norm_eps"]

    def ln(x, g, b):
        mu = jnp.mean(x, axis=-1, keepdims=True)
        var = jnp.mean((x - mu) ** 2, axis=-1, keepdims=True)
        return (x - mu) * jax.lax.rsqrt(var + eps) * g + b

    B, S = input_ids.shape
    pos_ids = jnp.arange(S)
    x = (params["word_emb"][input_ids]
         + params["pos_emb"][pos_ids][None, :, :]
         + params["type_emb"][type_ids]).astype(jnp.float32)
    x = ln(x, params["emb_ln_g"], params["emb_ln_b"])
    x = x @ params["w_map"] + params["b_map"]
    for lp in params["layers"]:
        fft_real = jnp.fft.fft(jnp.fft.fft(x, axis=-1), axis=-2).real
        y = ln(fft_real + x, lp["ln1_g"], lp["ln1_b"])
        h = jax.nn.gelu(y @ lp["w_ff"] + lp["b_ff"], approximate=False)
        out = h @ lp["w_out"] + lp["b_out"]
        x = ln(out + y, lp["ln2_g"], lp["ln2_b"])
    pooled = jnp.tanh(x[:, 0, :] @ params["pool_w"] + params["pool_b"])
    return x, pooled


def fnet_reference_matched(params, input_ids, type_ids, cfg):
    """Mirrors the kernels exactly (bf16 matmul operands, f32 accumulation)."""
    eps = cfg["layer_norm_eps"]
    H = cfg["hidden_size"]

    def ln(x, g, b):
        mu = jnp.mean(x, axis=-1, keepdims=True)
        var = jnp.mean((x - mu) ** 2, axis=-1, keepdims=True)
        return (x - mu) * jax.lax.rsqrt(var + eps) * g + b

    B, S = input_ids.shape
    pos_ids = jnp.arange(S)
    summed = (params["word_emb"][input_ids]
              + params["pos_emb"][pos_ids][None, :, :]
              + params["type_emb"][type_ids]).astype(jnp.float32)
    y = ln(summed, params["emb_ln_g"], params["emb_ln_b"])
    x = jnp.einsum("bse,eh->bsh", y.astype(jnp.bfloat16),
                   params["w_map"].astype(jnp.bfloat16),
                   preferred_element_type=jnp.float32) + params["b_map"]

    cs, ss = dft_real_matrices(S)
    ch, sh = dft_real_matrices(H)
    ch_b, sh_b = ch.astype(jnp.bfloat16), sh.astype(jnp.bfloat16)
    cs_b, ss_b = cs.astype(jnp.bfloat16), ss.astype(jnp.bfloat16)
    for lp in params["layers"]:
        xb = x.astype(jnp.bfloat16)
        xc = jnp.einsum("bsh,hk->bsk", xb, ch_b,
                        preferred_element_type=jnp.float32).astype(jnp.bfloat16)
        xs = jnp.einsum("bsh,hk->bsk", xb, sh_b,
                        preferred_element_type=jnp.float32).astype(jnp.bfloat16)
        fft_real = (jnp.einsum("ts,bsh->bth", cs_b, xc,
                               preferred_element_type=jnp.float32)
                    - jnp.einsum("ts,bsh->bth", ss_b, xs,
                                 preferred_element_type=jnp.float32))
        y1 = ln(fft_real + x, lp["ln1_g"], lp["ln1_b"])
        h = jnp.einsum("bsh,hi->bsi", y1.astype(jnp.bfloat16),
                       lp["w_ff"].astype(jnp.bfloat16),
                       preferred_element_type=jnp.float32) + lp["b_ff"]
        h = jax.nn.gelu(h, approximate=False)
        out = jnp.einsum("bsi,ih->bsh", h.astype(jnp.bfloat16),
                         lp["w_out"].astype(jnp.bfloat16),
                         preferred_element_type=jnp.float32) + lp["b_out"]
        x = ln(out + y1, lp["ln2_g"], lp["ln2_b"])
    pooled = jnp.tanh(x[:, 0, :] @ params["pool_w"] + params["pool_b"])
    return x, pooled


# ----------------------------------------------------------------------------
# Parameter init + main
# ----------------------------------------------------------------------------
def init_params(cfg, key):
    V, E, H, I = (cfg["vocab_size"], cfg["embedding_size"],
                  cfg["hidden_size"], cfg["intermediate_size"])
    P, T, L = (cfg["max_position_embeddings"], cfg["type_vocab_size"],
               cfg["num_hidden_layers"])
    ks = iter(jax.random.split(key, 16 + 4 * L))
    nrm = lambda k, s: (0.02 * jax.random.normal(k, s)).astype(jnp.float32)

    word_emb = nrm(next(ks), (V, E))
    word_emb = word_emb.at[cfg["pad_token_id"]].set(0.0)  # padding_idx
    params = {
        "word_emb": word_emb,
        "pos_emb": nrm(next(ks), (P, E)),
        "type_emb": nrm(next(ks), (T, E)),
        "emb_ln_g": jnp.ones((1, E), jnp.float32),
        "emb_ln_b": jnp.zeros((1, E), jnp.float32),
        "w_map": nrm(next(ks), (E, H)),          # hidden_mapping (E -> H)
        "b_map": jnp.zeros((1, H), jnp.float32),
        "pool_w": nrm(next(ks), (H, H)),
        "pool_b": jnp.zeros((1, H), jnp.float32),
        "layers": [],
    }
    for _ in range(L):
        params["layers"].append({
            "ln1_g": jnp.ones((1, H), jnp.float32),
            "ln1_b": jnp.zeros((1, H), jnp.float32),
            "w_ff": nrm(next(ks), (H, I)),
            "b_ff": jnp.zeros((1, I), jnp.float32),
            "w_out": nrm(next(ks), (I, H)),
            "b_out": jnp.zeros((1, H), jnp.float32),
            "ln2_g": jnp.ones((1, H), jnp.float32),
            "ln2_b": jnp.zeros((1, H), jnp.float32),
        })
    return params


if __name__ == "__main__":
    cfg = dict(
        vocab_size=100,
        embedding_size=16,
        hidden_size=32,
        intermediate_size=64,
        max_position_embeddings=8,
        type_vocab_size=2,
        num_hidden_layers=2,
        pad_token_id=0,
        layer_norm_eps=1e-12,
        dropout_rate=0.0,      # eval mode
        fourier="fft",
    )
    B, S = 2, 8
    key = jax.random.PRNGKey(0)
    k_params, k_ids, k_types = jax.random.split(key, 3)

    params = init_params(cfg, k_params)
    input_ids = jax.random.randint(k_ids, (B, S), 1, cfg["vocab_size"])
    type_ids = jax.random.randint(k_types, (B, S), 0, cfg["type_vocab_size"])

    model = prepare_model(params, cfg, S)      # one-time bf16 casts + DFT mats
    seq_out, pooled_out = fnet_forward(model, input_ids, type_ids, cfg)
    jax.block_until_ready((seq_out, pooled_out))

    # Tight check vs a pure-JAX reference that mirrors the kernel math (bf16
    # matmul operands, f32 accumulation / LayerNorm / GELU).
    m_seq, m_pool = fnet_reference_matched(params, input_ids, type_ids, cfg)
    assert jnp.allclose(seq_out, m_seq, atol=2e-3, rtol=2e-3)
    assert jnp.allclose(pooled_out, m_pool, atol=2e-3, rtol=2e-3)

    # Looser check vs the original full-f32 jnp.fft reference (bf16 matmul
    # operands introduce ~1% relative error; this bounds total drift).
    r_seq, r_pool = fnet_reference_fft_f32(params, input_ids, type_ids, cfg)
    assert jnp.allclose(seq_out, r_seq, atol=1e-1, rtol=1e-1)
    assert jnp.allclose(pooled_out, r_pool, atol=1e-1, rtol=1e-1)

    print("KERNEL_OK")
</pallas_src>

<mosaic_0001>
module attributes {stable_mosaic.version = 11 : i64} {
  func.func @embeddings_kernel(%arg0: i32, %arg1: i32, %arg2: memref<1x8x16xf32, #tpu.memory_space<vmem>>, %arg3: memref<1x16xf32, #tpu.memory_space<vmem>>, %arg4: memref<1x16xf32, #tpu.memory_space<vmem>>, %arg5: memref<16x32xbf16, #tpu.memory_space<vmem>>, %arg6: memref<1x32xf32, #tpu.memory_space<vmem>>, %arg7: memref<1x8x32xf32, #tpu.memory_space<vmem>>) attributes {dimension_semantics = [#tpu.dimension_semantics<parallel>, #tpu.dimension_semantics<parallel>], iteration_bounds = array<i64: 2, 1>, scalar_prefetch = 0 : i64, scratch_operands = 0 : i64, tpu.core_type = #tpu.core_type<tc>, window_params = [{transform_indices = @transform_0, window_bounds = array<i64: 1, 8, 16>}, {pipeline_mode = #tpu.pipeline_mode<synchronous>, transform_indices = @transform_1, window_bounds = array<i64: 1, 16>}, {pipeline_mode = #tpu.pipeline_mode<synchronous>, transform_indices = @transform_2, window_bounds = array<i64: 1, 16>}, {pipeline_mode = #tpu.pipeline_mode<synchronous>, transform_indices = @transform_3, window_bounds = array<i64: 16, 32>}, {pipeline_mode = #tpu.pipeline_mode<synchronous>, transform_indices = @transform_4, window_bounds = array<i64: 1, 32>}, {transform_indices = @transform_5, window_bounds = array<i64: 1, 8, 32>}]} {
    %c0 = arith.constant 0 : index
    %c0_0 = arith.constant 0 : index
    %c0_1 = arith.constant 0 : index
    %0 = vector.load %arg2[%c0, %c0_0, %c0_1] : memref<1x8x16xf32, #tpu.memory_space<vmem>>, vector<1x8x16xf32>
    %1 = vector.shape_cast %0 : vector<1x8x16xf32> to vector<8x16xf32>
    %c0_2 = arith.constant 0 : index
    %c0_3 = arith.constant 0 : index
    %2 = vector.load %arg3[%c0_2, %c0_3] : memref<1x16xf32, #tpu.memory_space<vmem>>, vector<1x16xf32>
    %c0_4 = arith.constant 0 : index
    %c0_5 = arith.constant 0 : index
    %3 = vector.load %arg4[%c0_4, %c0_5] : memref<1x16xf32, #tpu.memory_space<vmem>>, vector<1x16xf32>
    %cst = arith.constant dense<0.000000e+00> : vector<8xf32>
    %4 = vector.multi_reduction <add>, %1, %cst [1] : vector<8x16xf32> to vector<8xf32>
    %5 = vector.shape_cast %4 : vector<8xf32> to vector<8x1xf32>
    %cst_6 = arith.constant 1.600000e+01 : f32
    %6 = vector.broadcast %cst_6 : f32 to vector<8x1xf32>
    %7 = arith.divf %5, %6 : vector<8x1xf32>
    %8 = vector.broadcast %7 : vector<8x1xf32> to vector<8x16xf32>
    %9 = arith.subf %1, %8 : vector<8x16xf32>
    %10 = arith.mulf %9, %9 : vector<8x16xf32>
    %cst_7 = arith.constant dense<0.000000e+00> : vector<8xf32>
    %11 = vector.multi_reduction <add>, %10, %cst_7 [1] : vector<8x16xf32> to vector<8xf32>
    %12 = vector.shape_cast %11 : vector<8xf32> to vector<8x1xf32>
    %cst_8 = arith.constant 1.600000e+01 : f32
    %13 = vector.broadcast %cst_8 : f32 to vector<8x1xf32>
    %14 = arith.divf %12, %13 : vector<8x1xf32>
    %15 = vector.broadcast %7 : vector<8x1xf32> to vector<8x16xf32>
    %16 = arith.subf %1, %15 : vector<8x16xf32>
    %cst_9 = arith.constant 9.99999996E-13 : f32
    %17 = vector.broadcast %cst_9 : f32 to vector<8x1xf32>
    %18 = arith.addf %14, %17 : vector<8x1xf32>
    %19 = math.rsqrt %18 : vector<8x1xf32>
    %20 = vector.broadcast %19 : vector<8x1xf32> to vector<8x16xf32>
    %21 = arith.mulf %16, %20 : vector<8x16xf32>
    %22 = vector.broadcast %2 : vector<1x16xf32> to vector<8x16xf32>
    %23 = arith.mulf %21, %22 : vector<8x16xf32>
    %24 = vector.broadcast %3 : vector<1x16xf32> to vector<8x16xf32>
    %25 = arith.addf %23, %24 : vector<8x16xf32>
    %26 = arith.truncf %25 : vector<8x16xf32> to vector<8x16xbf16>
    %c0_10 = arith.constant 0 : index
    %c0_11 = arith.constant 0 : index
    %27 = vector.load %arg5[%c0_10, %c0_11] : memref<16x32xbf16, #tpu.memory_space<vmem>>, vector<16x32xbf16>
    %cst_12 = arith.constant dense<0.000000e+00> : vector<8x32xf32>
    %28 = tpu.matmul %26, %27, %cst_12 {dimension_numbers = #tpu.dot_dimension_numbers<[1], [0], [0], [1], [0, 0, 1, 1], [], []>} : vector<8x16xbf16>, vector<16x32xbf16>, vector<8x32xf32> -> vector<8x32xf32>
    %c0_13 = arith.constant 0 : index
    %c0_14 = arith.constant 0 : index
    %29 = vector.load %arg6[%c0_13, %c0_14] : memref<1x32xf32, #tpu.memory_space<vmem>>, vector<1x32xf32>
    %30 = vector.broadcast %29 : vector<1x32xf32> to vector<8x32xf32>
    %31 = arith.addf %28, %30 : vector<8x32xf32>
    %c0_15 = arith.constant 0 : index
    %c0_16 = arith.constant 0 : index
    %c0_17 = arith.constant 0 : index
    %32 = vector.load %arg7[%c0_15, %c0_16, %c0_17] : memref<1x8x32xf32, #tpu.memory_space<vmem>>, vector<1x8x32xf32>
    %33 = vector.shape_cast %32 : vector<1x8x32xf32> to vector<8x32xf32>
    %34 = vector.shape_cast %31 : vector<8x32xf32> to vector<1x8x32xf32>
    tpu.vector_store %arg7[%c0_15, %c0_16, %c0_17], %34 {strides = array<i32>} : memref<1x8x32xf32, #tpu.memory_space<vmem>>, vector<1x8x32xf32>,
    return
  }
  func.func @transform_0(%arg0: i32, %arg1: i32) -> (i32, i32, i32) {
    %c0_i32 = arith.constant 0 : i32
    %c0_i32_0 = arith.constant 0 : i32
    return %arg0, %arg1, %c0_i32 : i32, i32, i32
  }
  func.func @transform_1(%arg0: i32, %arg1: i32) -> (i32, i32) {
    %c0_i32 = arith.constant 0 : i32
    %c0_i32_0 = arith.constant 0 : i32
    %c0_i32_1 = arith.constant 0 : i32
    return %c0_i32, %c0_i32_0 : i32, i32
  }
  func.func @transform_2(%arg0: i32, %arg1: i32) -> (i32, i32) {
    %c0_i32 = arith.constant 0 : i32
    %c0_i32_0 = arith.constant 0 : i32
    %c0_i32_1 = arith.constant 0 : i32
    return %c0_i32, %c0_i32_0 : i32, i32
  }
  func.func @transform_3(%arg0: i32, %arg1: i32) -> (i32, i32) {
    %c0_i32 = arith.constant 0 : i32
    %c0_i32_0 = arith.constant 0 : i32
    %c0_i32_1 = arith.constant 0 : i32
    return %c0_i32, %c0_i32_0 : i32, i32
  }
  func.func @transform_4(%arg0: i32, %arg1: i32) -> (i32, i32) {
    %c0_i32 = arith.constant 0 : i32
    %c0_i32_0 = arith.constant 0 : i32
    %c0_i32_1 = arith.constant 0 : i32
    return %c0_i32, %c0_i32_0 : i32, i32
  }
  func.func @transform_5(%arg0: i32, %arg1: i32) -> (i32, i32, i32) {
    %c0_i32 = arith.constant 0 : i32
    %c0_i32_0 = arith.constant 0 : i32
    return %arg0, %arg1, %c0_i32 : i32, i32, i32
  }
}

</mosaic_0001>

<llo_original>
// kernel: tpu_custom_call.1
$region0: #{tpu_custom_call.1}
  #allocation0 [shape = 'u32[]', space=smem, size = 0x4, offset = 0x4, fixed_abs, tag = 'smem constant byte address 0x4 - core index']
  #allocation1 [shape = 'u32[144,128]{1,0:T(1,128)}', space=vmem, size = 0x12000, scoped, tag = 'internal scratch']
  %s0 = inlined_call_operand.hbm [shape: f32[2,8,16], index: 0, kind: input, shape index: {}]
  %s1 = inlined_call_operand.vmem [shape: f32[1,16], index: 1, kind: input, shape index: {}]
  %s2 = inlined_call_operand.vmem [shape: f32[1,16], index: 2, kind: input, shape index: {}]
  %s3 = inlined_call_operand.vmem [shape: bf16[16,32], index: 3, kind: input, shape index: {}]
  %s4 = inlined_call_operand.vmem [shape: f32[1,32], index: 4, kind: input, shape index: {}]
  %s5 = inlined_call_operand.hbm [shape: f32[2,8,32], index: 5, kind: output, shape index: {}]
  %s6 = sld [smem:[#allocation0]]
  $region57: #{tpu_custom_call.1} parent=0
    _
  %s8 = ssub.s32 1, %s6
  %s9 = scalar_select 0, %s8, %s6
  $region1: #{tpu_custom_call.1} parent=0
    #allocation2 [shape = 'u8[8192]{0}', space=vmem, size = 0x2000, scoped, tag = 'input window, operand 0']
    #allocation3 [shape = 's32[2]{0}', space=sflag, size = 0x8, scoped, tag = 'scoped memory for tpu_custom_call.1']
    #allocation4 [shape = 's32[2]{0}', space=sflag, size = 0x8, scoped, tag = 'scoped memory for tpu_custom_call.1']
    #allocation5 [shape = 'u8[8192]{0}', space=vmem, size = 0x2000, scoped, tag = 'output window, operand 0']
    %10 = vsyncpa [#allocation3], 0
    %s11 = scalar_lea.sflag [#allocation3], 1
    %12 = vsyncpa %s11, 0
    %13 = vsyncpa [#allocation4], 0
    %s14 = scalar_lea.sflag [#allocation4], 1
    %15 = vsyncpa %s14, 0
    loop: start=0, step=1, limit=4
    $region2: #{tpu_custom_call.1} parent=1 // loop_pre_header
      _
    $region3: #{tpu_custom_call.1} parent=1 // loop_header
      %s17 = sphi 0, %s21
      %p18 = scmp.ge.s32.totalorder %s17, 4
      %s24 = sphi 0, %s36
      %s25 = sphi 0, %s32
      %s26 = sphi 0, %s24
      %s27 = sphi 0, %s25
      %s28 = sphi 0, %s26
      %s29 = sphi 0, %s27
      %s41 = sphi 0, %s43
      %s44 = sphi 0, %s41
      %s45 = sphi 0, %s44
      %s61 = sphi 0, %s45
      %s65 = sphi 0, %s65
      %s67 = sphi 0, %s65
      %s68 = sphi 0, %s67
      %s82 = sphi 0, %s68
      %s86 = sphi 0, %s86
      %s88 = sphi 0, %s86
      %s89 = sphi 0, %s88
      %s103 = sphi 0, %s89
      %s107 = sphi 0, %s107
      %s109 = sphi 0, %s107
      %s110 = sphi 0, %s109
      %s124 = sphi 0, %s110
      %s128 = sphi 0, %s128
      %s130 = sphi 0, %s128
      %s131 = sphi 0, %s130
      %s145 = sphi 0, %s131
      %s153 = sphi 0, %s155
      %s156 = sphi 0, %s153
      %s157 = sphi 0, %s156
      %s173 = sphi 0, %s157
    $region4: #{tpu_custom_call.1} parent=1 // loop_header_branch
      %20 = sbr.rel (%p18) target = $region8
    $region5: #{tpu_custom_call.1} parent=1 // loop_body
      %s22 = ssub.s32 %s17, 1
      %s23 = ssub.s32 %s17, 2
      %s30 = sadd.s32 1, %s25
      %p31 = scmp.ge.s32.totalorder %s30, 1
      %s32 = scalar_select %p31, 0, %s30
      %s33 = sadd.s32 1, %s24
      %s34 = scalar_select %p31, %s33, %s24
      %p35 = scmp.ge.s32.totalorder %s34, 2
      %s36 = scalar_select %p35, 0, %s34
      %s37 = ssub.s32 %s24, %s36
      %s38 = ssub.s32 %s25, %s32
      %s39 = sor.u32 %s37, %s38
      %p40 = scmp.eq.s32.totalorder %s39, 0
      %s42 = sadd.s32 %s41, 1
      %s43 = scalar_select %p40, %s41, %s42
      %p46 = pneg %p40
      %p47 = scmp.eq.s32.totalorder %s17, 1
      %p48 = por %p46, %p47
      %p49 = scmp.ne.s32.totalorder %s41, %s44
      %p50 = scmp.eq.s32.totalorder %s17, 0
      %p51 = por %p49, %p50
      %p52 = scmp.ne.s32.totalorder %s41, %s44
      %p53 = scmp.eq.s32.totalorder %s22, 1
      %p54 = por %p52, %p53
      %p55 = scmp.ne.s32.totalorder %s44, %s45
      %p56 = scmp.eq.s32.totalorder %s22, 0
      %p57 = por %p55, %p56
      %p58 = scmp.ne.s32.totalorder %s44, %s45
      %p59 = scmp.eq.s32.totalorder %s23, 1
      %p60 = por %p58, %p59
      %p62 = scmp.ne.s32.totalorder %s45, %s61
      %p63 = scmp.eq.s32.totalorder %s23, 0
      %p64 = por %p62, %p63
      %s66 = sadd.s32 %s65, 1
      %p69 = scmp.eq.s32.totalorder %s17, 1
      %p70 = scmp.ne.s32.totalorder %s65, %s67
      %p71 = scmp.eq.s32.totalorder %s17, 0
      %p72 = por %p70, %p71
      %p73 = scmp.ne.s32.totalorder %s65, %s67
      %p74 = scmp.eq.s32.totalorder %s22, 1
      %p75 = por %p73, %p74
      %p76 = scmp.ne.s32.totalorder %s67, %s68
      %p77 = scmp.eq.s32.totalorder %s22, 0
      %p78 = por %p76, %p77
      %p79 = scmp.ne.s32.totalorder %s67, %s68
      %p80 = scmp.eq.s32.totalorder %s23, 1
      %p81 = por %p79, %p80
      %p83 = scmp.ne.s32.totalorder %s68, %s82
      %p84 = scmp.eq.s32.totalorder %s23, 0
      %p85 = por %p83, %p84
      %s87 = sadd.s32 %s86, 1
      %p90 = scmp.eq.s32.totalorder %s17, 1
      %p91 = scmp.ne.s32.totalorder %s86, %s88
      %p92 = scmp.eq.s32.totalorder %s17, 0
      %p93 = por %p91, %p92
      %p94 = scmp.ne.s32.totalorder %s86, %s88
      %p95 = scmp.eq.s32.totalorder %s22, 1
      %p96 = por %p94, %p95
      %p97 = scmp.ne.s32.totalorder %s88, %s89
      %p98 = scmp.eq.s32.totalorder %s22, 0
      %p99 = por %p97, %p98
      %p100 = scmp.ne.s32.totalorder %s88, %s89
      %p101 = scmp.eq.s32.totalorder %s23, 1
      %p102 = por %p100, %p101
      %p104 = scmp.ne.s32.totalorder %s89, %s103
      %p105 = scmp.eq.s32.totalorder %s23, 0
      %p106 = por %p104, %p105
      %s108 = sadd.s32 %s107, 1
      %p111 = scmp.eq.s32.totalorder %s17, 1
      %p112 = scmp.ne.s32.totalorder %s107, %s109
      %p113 = scmp.eq.s32.totalorder %s17, 0
      %p114 = por %p112, %p113
      %p115 = scmp.ne.s32.totalorder %s107, %s109
      %p116 = scmp.eq.s32.totalorder %s22, 1
      %p117 = por %p115, %p116
      %p118 = scmp.ne.s32.totalorder %s109, %s110
      %p119 = scmp.eq.s32.totalorder %s22, 0
      %p120 = por %p118, %p119
      %p121 = scmp.ne.s32.totalorder %s109, %s110
      %p122 = scmp.eq.s32.totalorder %s23, 1
      %p123 = por %p121, %p122
      %p125 = scmp.ne.s32.totalorder %s110, %s124
      %p126 = scmp.eq.s32.totalorder %s23, 0
      %p127 = por %p125, %p126
      %s129 = sadd.s32 %s128, 1
      %p132 = scmp.eq.s32.totalorder %s17, 1
      %p133 = scmp.ne.s32.totalorder %s128, %s130
      %p134 = scmp.eq.s32.totalorder %s17, 0
      %p135 = por %p133, %p134
      %p136 = scmp.ne.s32.totalorder %s128, %s130
      %p137 = scmp.eq.s32.totalorder %s22, 1
      %p138 = por %p136, %p137
      %p139 = scmp.ne.s32.totalorder %s130, %s131
      %p140 = scmp.eq.s32.totalorder %s22, 0
      %p141 = por %p139, %p140
      %p142 = scmp.ne.s32.totalorder %s130, %s131
      %p143 = scmp.eq.s32.totalorder %s23, 1
      %p144 = por %p142, %p143
      %p146 = scmp.ne.s32.totalorder %s131, %s145
      %p147 = scmp.eq.s32.totalorder %s23, 0
      %p148 = por %p146, %p147
      %s149 = ssub.s32 %s24, %s36
      %s150 = ssub.s32 %s25, %s32
      %s151 = sor.u32 %s149, %s150
      %p152 = scmp.eq.s32.totalorder %s151, 0
      %s154 = sadd.s32 %s153, 1
      %s155 = scalar_select %p152, %s153, %s154
      %p158 = pneg %p152
      %p159 = scmp.eq.s32.totalorder %s17, 1
      %p160 = por %p158, %p159
      %p161 = scmp.ne.s32.totalorder %s153, %s156
      %p162 = scmp.eq.s32.totalorder %s17, 0
      %p163 = por %p161, %p162
      %p164 = scmp.ne.s32.totalorder %s153, %s156
      %p165 = scmp.eq.s32.totalorder %s22, 1
      %p166 = por %p164, %p165
      %p167 = scmp.ne.s32.totalorder %s156, %s157
      %p168 = scmp.eq.s32.totalorder %s22, 0
      %p169 = por %p167, %p168
      %p170 = scmp.ne.s32.totalorder %s156, %s157
      %p171 = scmp.eq.s32.totalorder %s23, 1
      %p172 = por %p170, %p171
      %p174 = scmp.ne.s32.totalorder %s157, %s173
      %p175 = scmp.eq.s32.totalorder %s23, 0
      %p176 = por %p174, %p175
      %p177 = scmp.le.s32.totalorder 1, %s17
      %p178 = scmp.lt.s32.totalorder %s17, 3
      %p179 = pnand %p177, %p178
      %p180 = pneg %p179
      // Predicated region
      $region9: #{tpu_custom_call.1} parent=5 // pred_check
        _
      $region10: #{tpu_custom_call.1} parent=5 // pred_check_branch
        %182 = sbr.rel (%p179) target = $region12
      $region11: #{tpu_custom_call.1} parent=5 // pred_region
        %s183 = ssub.s32 %s17, 1
        // Predicated region
        $region13: #{tpu_custom_call.1} parent=11 // pred_check
          %p184 = pneg %p78
        $region14: #{tpu_custom_call.1} parent=11 // pred_check_branch
          %186 = sbr.rel (%p184) target = $region16
        $region15: #{tpu_custom_call.1} parent=11 // pred_region
          _
        $region16: #{tpu_custom_call.1} parent=11 // pred_fallthru
          _
        // Predicated region
        $region17: #{tpu_custom_call.1} parent=11 // pred_check
          %p187 = pneg %p99
        $region18: #{tpu_custom_call.1} parent=11 // pred_check_branch
          %189 = sbr.rel (%p187) target = $region20
        $region19: #{tpu_custom_call.1} parent=11 // pred_region
          _
        $region20: #{tpu_custom_call.1} parent=11 // pred_fallthru
          _
        // Predicated region
        $region21: #{tpu_custom_call.1} parent=11 // pred_check
          %p190 = pneg %p120
        $region22: #{tpu_custom_call.1} parent=11 // pred_check_branch
          %192 = sbr.rel (%p190) target = $region24
        $region23: #{tpu_custom_call.1} parent=11 // pred_region
          _
        $region24: #{tpu_custom_call.1} parent=11 // pred_fallthru
          _
        // Predicated region
        $region25: #{tpu_custom_call.1} parent=11 // pred_check
          %p193 = pneg %p141
        $region26: #{tpu_custom_call.1} parent=11 // pred_check_branch
          %195 = sbr.rel (%p193) target = $region28
        $region27: #{tpu_custom_call.1} parent=11 // pred_region
          _
        $region28: #{tpu_custom_call.1} parent=11 // pred_fallthru
          _
      $region12: #{tpu_custom_call.1} parent=5 // pred_fallthru
        _
      %p196 = scmp.lt.s32.totalorder %s17, 2
      // Predicated region
      $region29: #{tpu_custom_call.1} parent=5 // pred_check
        %p197 = pneg %p196
      $region30: #{tpu_custom_call.1} parent=5 // pred_check_branch
        %199 = sbr.rel (%p197) target = $region32
      $region31: #{tpu_custom_call.1} parent=5 // pred_region
        // Predicated region
        $region33: #{tpu_custom_call.1} parent=31 // pred_check
          %p200 = pneg %p51
        $region34: #{tpu_custom_call.1} parent=31 // pred_check_branch
          %202 = sbr.rel (%p200) target = $region36
        $region35: #{tpu_custom_call.1} parent=31 // pred_region
          %s203 = sand.u32 %s41, 1
          %s204 = scalar_lea.sflag [#allocation3], %s203
          %s205 = sand.u32 %s41, 1
          %s206 = smul.addr %s205, 8
          %s207 = scalar_lea.vmem [#allocation2], %s206
          %s209 = ssub.s32 128, 128
          %210 = vsyncadd %s204, %s209
          %s211 = sadd.s32 %s25, %s24
          %s212 = smul.addr %s211, 128
          %s213 = scalar_lea.hbm %s0, %s212
          %s215 = sshll.u32 %s207, 4
          %s216 = int_to_ptr.vmem [resolvable:$true] %s215
          %218 = dma.hbm_to_vmem [thread:$0]  %s213, 128, %s216, %s204
        $region36: #{tpu_custom_call.1} parent=31 // pred_fallthru
          _
      $region32: #{tpu_custom_call.1} parent=5 // pred_fallthru
        _
      %p219 = scmp.le.s32.totalorder 1, %s17
      %p220 = scmp.lt.s32.totalorder %s17, 3
      %p221 = pnand %p219, %p220
      %p222 = pneg %p221
      // Predicated region
      $region37: #{tpu_custom_call.1} parent=5 // pred_check
        _
      $region38: #{tpu_custom_call.1} parent=5 // pred_check_branch
        %224 = sbr.rel (%p221) target = $region40
      $region39: #{tpu_custom_call.1} parent=5 // pred_region
        %s225 = ssub.s32 %s17, 1
        %s226 = sand.u32 %s44, 1
        %s227 = scalar_lea.sflag [#allocation3], %s226
        %s228 = sand.u32 %s44, 1
        %s229 = smul.addr %s228, 8
        %s230 = scalar_lea.vmem [#allocation2], %s229
        // Predicated region
        $region41: #{tpu_custom_call.1} parent=39 // pred_check
          %p231 = pneg %p57
        $region42: #{tpu_custom_call.1} parent=39 // pred_check_branch
          %233 = sbr.rel (%p231) target = $region44
        $region43: #{tpu_custom_call.1} parent=39 // pred_region
          %234 = dma.done %s227, 128
        $region44: #{tpu_custom_call.1} parent=39 // pred_fallthru
          _
        %s235 = sand.u32 %s44, 1
        %s236 = scalar_lea.sflag [#allocation3], %s235
        %s237 = sand.u32 %s44, 1
        %s238 = smul.addr %s237, 8
        %s239 = scalar_lea.vmem [#allocation2], %s238
        %p240 = pneg %p57
        %p241 = pneg %p54
        %p242 = pneg %p78
        %p243 = pneg %p75
        %p244 = pneg %p99
        %p245 = pneg %p96
        %p246 = pneg %p120
        %p247 = pneg %p117
        %p248 = pneg %p141
        %p249 = pneg %p138
        %p250 = pneg %p169
        %p251 = pneg %p166
        %s252 = sand.u32 %s156, 1
        %s253 = scalar_lea.sflag [#allocation4], %s252
        %s254 = sand.u32 %s156, 1
        %s255 = smul.addr %s254, 8
        %s256 = scalar_lea.vmem [#allocation5], %s255
        %v258 = vld [vmem:[%s230] sm:$0xff]
        %v259 = vld [vmem:[%s1] sm:$0x1]
        %v260 = vld [vmem:[%s2] sm:$0x1]
        %vm261 = vcmask 130048
        %v262 = vsel %vm261, %v258, 0.0
        %263 = vadd.xlane.f32.xlu0 %v262
        %v264 = vpop.xlane.xlu0 %263
        %v265 = vrcp.pop 16.0
        %v266 = vmul.f32 %v264, %v265
        %v267 = vsub.f32 %v258, %v266
        %v268 = vmul.f32 %v267, %v267
        %v269 = vsel %vm261, %v268, 0.0
        %270 = vadd.xlane.f32.xlu0 %v269
        %v271 = vpop.xlane.xlu0 %270
        %v272 = vmul.f32 %v271, %v265
        %v273 = vadd.f32 %v272, 1e-12
        %v274 = vrsqrt.pop %v273
        %v275 = vmul.f32 %v267, %v274
        %v277 = vlaneseq
        %v278 = vshrl.u32 %v277, 7
        %v279 = vsub.s32 0, %v278
        %v280 = vrot.slane %v259, %v279
        %v282 = vmul.f32 %v275, %v280
        %v284 = vlaneseq
        %v285 = vshrl.u32 %v284, 7
        %v286 = vsub.s32 0, %v285
        %v287 = vrot.slane %v260, %v286
        %v289 = vadd.f32 %v282, %v287
        %v290 = vpack.c.bf16 %v289, %v289
        %v291 = vld [vmem:[%s3] sm:$0xf]
        %v292 = vld [vmem:[%s3 + $0x4] sm:$0xf]
        %v293 = vld [vmem:[%s4] sm:$0x1]
        %v295 = vlaneseq
        %v296 = vshrl.u32 %v295, 7
        %v297 = vsub.s32 0, %v296
        %v298 = vrot.slane %v293, %v297
        %v302 = vunpack.c.l.b16 %v291
        %v303 = vunpack.c.l.b16 %v292
        %v304 = vpack.c.b16 %v303, %v302
        %v307 = vsel %vm261, %v290, 0
        %309 = vmatprep.subr.bf16.mxu0 0
        %310 = vmatpush1.bf16.msra.mxu0 %v304
        %311 = vmatprep.subr.bf16.mxu0 0
        %312 = vmatpush1.bf16.msra.mxu0 0
        %313 = vmatprep.subr.bf16.mxu0 0
        %314 = vmatpush1.bf16.msra.mxu0 0
        %315 = vmatprep.subr.bf16.mxu0 0
        %316 = vmatpush1.bf16.msra.mxu0 0
        %317 = vmatprep.subr.bf16.mxu0 0
        %318 = vmatpush1.bf16.msra.mxu0 0
        %319 = vmatprep.subr.bf16.mxu0 0
        %320 = vmatpush1.bf16.msra.mxu0 0
        %321 = vmatprep.subr.bf16.mxu0 0
        %322 = vmatpush1.bf16.msra.mxu0 0
        %323 = vmatprep.subr.bf16.mxu0 0
        %324 = vmatpush1.bf16.msra.mxu0 0
        %325 = vmatprep.subr.bf16.mxu0 0
        %326 = vmatpush1.bf16.msra.mxu0 0
        %327 = vmatprep.subr.bf16.mxu0 0
        %328 = vmatpush1.bf16.msra.mxu0 0
        %329 = vmatprep.subr.bf16.mxu0 0
        %330 = vmatpush1.bf16.msra.mxu0 0
        %331 = vmatprep.subr.bf16.mxu0 0
        %332 = vmatpush1.bf16.msra.mxu0 0
        %333 = vmatprep.subr.bf16.mxu0 0
        %334 = vmatpush1.bf16.msra.mxu0 0
        %335 = vmatprep.subr.bf16.mxu0 0
        %336 = vmatpush1.bf16.msra.mxu0 0
        %337 = vmatprep.subr.bf16.mxu0 0
        %338 = vmatpush1.bf16.msra.mxu0 0
        %339 = vmatprep.subr.bf16.mxu0 0
        %340 = vmatpush1.bf16.msra.mxu0 0
        %341 = vmatprep.mubr.bf16.mxu0 0
        %342 = vmatmul.mubr.bf16.gmra.mrb[0].mxu0 %v307
        %v343 = vpop.f32.mrb[0].mxu0
        %v344 = vadd.f32 %v298, %v343
        %v345 = vpop.f32.mrb[0].mxu0
        %v346 = vpop.f32.mrb[0].mxu0
        %v347 = vpop.f32.mrb[0].mxu0
        %348 = vdwg.mxu0
        %vm349 = vcmask 261120
        %350 = vst.msk [vmem:[%s256] sm:$0xff] %vm349, %v344
        %s351 = sand.u32 %s156, 1
        %s352 = scalar_lea.sflag [#allocation4], %s351
        %s353 = sand.u32 %s156, 1
        %s354 = smul.addr %s353, 8
        %s355 = scalar_lea.vmem [#allocation5], %s354
        // Predicated region
        $region45: #{tpu_custom_call.1} parent=39 // pred_check
          %p356 = pneg %p166
        $region46: #{tpu_custom_call.1} parent=39 // pred_check_branch
          %358 = sbr.rel (%p356) target = $region48
        $region47: #{tpu_custom_call.1} parent=39 // pred_region
          %s360 = ssub.s32 128, 128
          %361 = vsyncadd %s352, %s360
          %s362 = sadd.s32 %s27, %s26
          %s363 = smul.addr %s362, 128
          %s364 = scalar_lea.hbm %s5, %s363
          %s366 = sshll.u32 %s355, 4
          %s367 = int_to_ptr.vmem [resolvable:$true] %s366
          %369 = dma.vmem_to_hbm [thread:$0]  %s367, 128, %s364, %s352
        $region48: #{tpu_custom_call.1} parent=39 // pred_fallthru
          _
      $region40: #{tpu_custom_call.1} parent=5 // pred_fallthru
        _
      %p370 = scmp.le.s32.totalorder 2, %s17
      // Predicated region
      $region49: #{tpu_custom_call.1} parent=5 // pred_check
        %p371 = pneg %p370
      $region50: #{tpu_custom_call.1} parent=5 // pred_check_branch
        %373 = sbr.rel (%p371) target = $region52
      $region51: #{tpu_custom_call.1} parent=5 // pred_region
        %s374 = ssub.s32 %s17, 2
        // Predicated region
        $region53: #{tpu_custom_call.1} parent=51 // pred_check
          %p375 = pneg %p172
        $region54: #{tpu_custom_call.1} parent=51 // pred_check_branch
          %377 = sbr.rel (%p375) target = $region56
        $region55: #{tpu_custom_call.1} parent=51 // pred_region
          %s378 = sand.u32 %s157, 1
          %s379 = scalar_lea.sflag [#allocation4], %s378
          %s380 = sand.u32 %s157, 1
          %s381 = smul.addr %s380, 8
          %s382 = scalar_lea.vmem [#allocation5], %s381
          %383 = dma.done %s379, 128
        $region56: #{tpu_custom_call.1} parent=51 // pred_fallthru
          _
      $region52: #{tpu_custom_call.1} parent=5 // pred_fallthru
        _
    $region6: #{tpu_custom_call.1} parent=1 // loop_footer
      %s21 = sadd.s32 1, %s17
    $region7: #{tpu_custom_call.1} parent=1 // loop_footer_branch
      %16 = sbr.rel target = $region3
    $region8: #{tpu_custom_call.1} parent=1 // loop_exit
      _
    %384 = vsyncpa [#allocation3], 1
    %s385 = scalar_lea.sflag [#allocation3], 1
    %386 = vsyncpa %s385, 1
    %387 = vsyncpa [#allocation4], 1
    %s388 = scalar_lea.sflag [#allocation4], 1
    %389 = vsyncpa %s388, 1

</llo_original>
